<compile_context>
chip_gen: v5e
topology: v5e:2x2
jax: 0.10.0
libtpu: 0.0.40
codegen_flags: <defaults>
</compile_context>

<pallas_src>
import functools

import jax
import jax.numpy as jnp
from jax.experimental import pallas as pl
from jax.experimental.pallas import tpu as pltpu

# Generation-agnostic VMEM sizing: ~24 MiB of live buffers (double-buffered
# input block + accumulator scratch) under an explicit 32 MiB scoped limit.
_VMEM_TARGET_BYTES = 24 << 20
_VMEM_LIMIT_BYTES = 32 << 20
# Cap on unrolled 128-lane chunk adds per grid step (bounds kernel code size).
_MAX_CHUNKS = 32


def _pick_tile_m(m, c, itemsize, budget_bytes):
    """Lane-axis tile.  Either the exact full axis `m` (single block along M,
    block == full array dim, no masking) when it fits the budget/unroll cap,
    or a multiple of 128 strictly smaller than m (cdiv grid + masked tail)."""
    m_pad = ((m + 127) // 128) * 128
    lanes = max(max(budget_bytes, 0) // (2 * c * itemsize), 128)
    tile = max(min((lanes // 128) * 128, _MAX_CHUNKS * 128), 128)
    if tile >= m_pad:
        return m            # one block covering the whole axis
    return tile             # multiple blocks, 128-aligned, tail masked


def _stats_kernel(x_ref, stats_ref, sum_ref, sq_ref, shift_ref, *,
                  m_total, n_per_channel, need_mask):
    """x_ref: (1, C, TILE) block.  Accumulate per-channel shifted sums /
    sums-of-squares into (C, 128) accumulators (VALU-only adds); on the last
    grid step do one cross-lane reduce and emit
    [mean_of_ch_means, mean, mean_of_ch_stds, std] (ddof=1)."""
    ni = pl.program_id(0)
    mi = pl.program_id(1)
    _, c, tile = x_ref.shape
    n_full = tile // 128
    rem = tile % 128                       # only nonzero for full-axis blocks

    is_first = jnp.logical_and(ni == 0, mi == 0)
    is_last = jnp.logical_and(ni == pl.num_programs(0) - 1,
                              mi == pl.num_programs(1) - 1)

    @pl.when(is_first)
    def _():
        sum_ref[...] = jnp.zeros_like(sum_ref)
        sq_ref[...] = jnp.zeros_like(sq_ref)
        # Per-channel shift (first element of every channel) -> numerically
        # stable shifted sum-of-squares accumulation.
        first = x_ref[0, :, 0:1].astype(jnp.float32)          # (C, 1)
        shift_ref[...] = jnp.broadcast_to(first, (c, 128))

    shift = shift_ref[...]                                     # (C, 128)
    if need_mask:
        lane = jax.lax.broadcasted_iota(jnp.int32, (c, 128), 1)
        base = mi * tile

    # Steady-state accumulation: pure VALU adds on 128-lane chunks.  Small C
    # accumulates in registers (single RMW per step); large C streams through
    # the VMEM-resident accumulators directly.
    use_local = c <= 64
    if use_local and n_full:
        acc_s = jnp.zeros((c, 128), jnp.float32)
        acc_q = jnp.zeros((c, 128), jnp.float32)
    for k in range(n_full):
        d = x_ref[0, :, k * 128:(k + 1) * 128].astype(jnp.float32) - shift
        if need_mask:
            d = jnp.where(base + (k * 128 + lane) < m_total, d, 0.0)
        if use_local:
            acc_s = acc_s + d
            acc_q = acc_q + d * d
        else:
            sum_ref[...] += d
            sq_ref[...] += d * d
    if use_local and n_full:
        sum_ref[...] += acc_s
        sq_ref[...] += acc_q

    if rem:
        # Remainder lanes exist only when the block covers the full axis
        # exactly (never padded), so no masking is needed here.
        dr = x_ref[0, :, n_full * 128:].astype(jnp.float32) - shift[:, :rem]
        sum_ref[:, :rem] += dr
        sq_ref[:, :rem] += dr * dr

    @pl.when(is_last)
    def _():
        cnt = jnp.float32(n_per_channel)
        ddof_c = jnp.float32(max(n_per_channel - 1, 1))
        # Single cross-lane (XLU) reduce, deferred to the finalize step.
        a = jnp.sum(sum_ref[...], axis=1, keepdims=True)       # (C,1) sum(x-s)
        b = jnp.sum(sq_ref[...], axis=1, keepdims=True)        # (C,1) sum((x-s)^2)
        s0 = shift_ref[:, 0:1]                                 # (C,1)

        ch_mean = s0 + a / cnt
        ssw = jnp.maximum(b - a * (a / cnt), 0.0)              # sum((x-mu_c)^2)
        ch_std = jnp.sqrt(ssw / ddof_c)

        c_f = jnp.float32(c)
        mu = jnp.sum(ch_mean) / c_f                            # == overall mean
        ss_between = cnt * jnp.sum((ch_mean - mu) ** 2)
        total = c * n_per_channel
        ddof_t = jnp.float32(max(total - 1, 1))
        ov_var = jnp.maximum(jnp.sum(ssw) + ss_between, 0.0) / ddof_t

        stats_ref[0, 0] = mu                      # mean of per-channel means
        stats_ref[0, 1] = mu                      # overall mean (equal counts)
        stats_ref[0, 2] = jnp.sum(ch_std) / c_f   # mean of per-channel stds
        stats_ref[0, 3] = jnp.sqrt(ov_var)        # overall std (ddof=1)


def _compute_stats(x3):
    """x3: (N, C, M) view of the input (free reshape, no transpose).
    Returns a (1, 4) f32 array:
    [mean_of_channel_means, mean, mean_of_channel_stds, std]."""
    n, c, m = x3.shape
    itemsize = jnp.dtype(x3.dtype).itemsize
    scratch_bytes = 3 * c * 128 * 4
    tile = _pick_tile_m(m, c, itemsize, _VMEM_TARGET_BYTES - scratch_bytes)
    m_blocks = -(-m // tile)                          # cdiv
    need_mask = (m_blocks * tile) != m
    kernel = functools.partial(_stats_kernel, m_total=m,
                               n_per_channel=n * m, need_mask=need_mask)

    return pl.pallas_call(
        kernel,
        out_shape=jax.ShapeDtypeStruct((1, 4), jnp.float32),
        grid_spec=pltpu.PrefetchScalarGridSpec(
            num_scalar_prefetch=0,
            grid=(n, m_blocks),
            in_specs=[pl.BlockSpec((1, c, tile), lambda ni, mi: (ni, 0, mi))],
            out_specs=pl.BlockSpec((1, 4), lambda ni, mi: (0, 0),
                                   memory_space=pltpu.MemorySpace.SMEM),
            scratch_shapes=[pltpu.VMEM((c, 128), jnp.float32),   # sum
                            pltpu.VMEM((c, 128), jnp.float32),   # sum of sq
                            pltpu.VMEM((c, 128), jnp.float32)],  # shift
        ),
        compiler_params=pltpu.CompilerParams(
            # Both grid axes feed the shared accumulator -> reduction axes.
            # TODO(synk): v7x dual-TC split would need per-core accumulators.
            dimension_semantics=("arbitrary", "arbitrary"),
            vmem_limit_bytes=_VMEM_LIMIT_BYTES),
        cost_estimate=pl.CostEstimate(flops=4 * n * c * m,
                                      transcendentals=0,
                                      bytes_accessed=n * c * m * itemsize + 16),
    )(x3)


def debug_forward(name, x):
    """JAX/Pallas equivalent of Debug(name).forward(x).  Returns x unchanged
    (the same array object -- no pass-through copy is made)."""
    print(name)
    print('----')
    print('Shape {}'.format(x.shape))

    if x.ndim == 2:
        b, d = x.shape
        stats = _compute_stats(x.reshape(1, b, d))       # free reshape
        # TODO(synk): device_get forces a sync; module semantics require
        # printing the values here.
        s = jax.device_get(stats)[0]
        print('Stats mean {:.2f} var {:.2f}'.format(float(s[1]), float(s[3])))
    elif x.ndim == 4:
        n, c, h, w = x.shape
        stats = _compute_stats(x.reshape(n, c, h * w))   # free reshape
        s = jax.device_get(stats)[0]
        print('Stats mean {:.2f} {:.2f} var s{:.2f} {:.2f}'.format(
            float(s[0]), float(s[1]), float(s[2]), float(s[3])))
    # Other ranks: torch module only prints the shape.

    print()
    return x


# ----------------------------- self-test ------------------------------------
def _ref_stats_3d(x3):
    n, c, m = x3.shape
    xt = jnp.transpose(x3, (1, 0, 2)).reshape(c, -1)
    return jnp.stack([
        jnp.mean(jnp.mean(xt, axis=1)),
        jnp.mean(xt),
        jnp.mean(jnp.std(xt, axis=1, ddof=1)),
        jnp.std(xt, ddof=1),
    ])


def _check(x4d):
    n, c = x4d.shape[0], x4d.shape[1]
    x3 = x4d.reshape(n, c, -1)
    got = jax.device_get(_compute_stats(x3))[0]
    ref = jax.device_get(_ref_stats_3d(x3))
    assert jnp.allclose(jnp.asarray(got), jnp.asarray(ref),
                        atol=1e-3, rtol=1e-3), (got, ref)


if __name__ == "__main__":
    key = jax.random.PRNGKey(0)
    k1, k2, k3, k4, k5 = jax.random.split(key, 5)

    # --- 4D NCHW path: aligned spatial, single M block ----------------------
    x = jax.random.normal(k1, (2, 4, 16, 16), dtype=jnp.float32) * 2.0 + 3.0
    y = debug_forward("debug_layer", x)
    jax.block_until_ready(y)
    assert y is x                      # pass-through: same array, no copy
    _check(x)

    # --- non-lane-aligned small spatial (remainder-lane path) ---------------
    x_odd = jax.random.normal(k2, (2, 3, 5, 7), dtype=jnp.float32) + 10.0
    jax.block_until_ready(debug_forward("debug_odd", x_odd))
    _check(x_odd)

    # --- multi-block M, exact tiling (no tail mask) --------------------------
    x_big = jax.random.normal(k3, (2, 8, 64, 1024), dtype=jnp.float32) * 0.5 + 1.0
    jax.block_until_ready(debug_forward("debug_big", x_big))
    _check(x_big)

    # --- multi-block M with masked tail block --------------------------------
    x_tail = jax.random.normal(k4, (1, 16, 100, 60), dtype=jnp.float32) - 4.0
    jax.block_until_ready(debug_forward("debug_tail", x_tail))
    _check(x_tail)

    # --- 2D path --------------------------------------------------------------
    x2d = jax.random.normal(k5, (8, 32), dtype=jnp.float32)
    y2d = debug_forward("debug_2d", x2d)
    assert y2d is x2d
    s2d = jax.device_get(_compute_stats(x2d.reshape(1, 8, 32)))[0]
    assert abs(float(s2d[1]) - float(jnp.mean(x2d))) < 1e-3
    assert abs(float(s2d[3]) - float(jnp.std(x2d, ddof=1))) < 1e-3

    print("KERNEL_OK")
</pallas_src>

<mosaic_0001>
module attributes {stable_mosaic.version = 11 : i64} {
  func.func @_stats_kernel(%arg0: i32, %arg1: i32, %arg2: memref<1x4x256xf32, #tpu.memory_space<vmem>>, %arg3: memref<1x4xf32, #tpu.memory_space<smem>>, %arg4: memref<4x128xf32, #tpu.memory_space<vmem>>, %arg5: memref<4x128xf32, #tpu.memory_space<vmem>>, %arg6: memref<4x128xf32, #tpu.memory_space<vmem>>) attributes {dimension_semantics = [#tpu.dimension_semantics<arbitrary>, #tpu.dimension_semantics<arbitrary>], iteration_bounds = array<i64: 2, 1>, scalar_prefetch = 0 : i64, scratch_operands = 3 : i64, tpu.core_type = #tpu.core_type<tc>, window_params = [{transform_indices = @transform_0, window_bounds = array<i64: 1, 4, 256>}, {transform_indices = @transform_1, window_bounds = array<i64: 1, 4>}]} {
    %c0_i32 = arith.constant 0 : i32
    %0 = arith.cmpi eq, %arg0, %c0_i32 : i32
    %c0_i32_0 = arith.constant 0 : i32
    %1 = arith.cmpi eq, %arg1, %c0_i32_0 : i32
    %2 = arith.andi %0, %1 : i1
    %c1_i32 = arith.constant 1 : i32
    %3 = arith.cmpi eq, %arg0, %c1_i32 : i32
    %c0_i32_1 = arith.constant 0 : i32
    %4 = arith.cmpi eq, %arg1, %c0_i32_1 : i32
    %5 = arith.andi %3, %4 : i1
    %6 = arith.extui %2 : i1 to i32
    %c0_i32_2 = arith.constant 0 : i32
    %7 = arith.cmpi ne, %6, %c0_i32_2 : i32
    scf.if %7 {
      %cst_19 = arith.constant 0.000000e+00 : f32
      %31 = vector.broadcast %cst_19 : f32 to vector<4x128xf32>
      %c0_20 = arith.constant 0 : index
      %c0_21 = arith.constant 0 : index
      %32 = vector.load %arg4[%c0_20, %c0_21] : memref<4x128xf32, #tpu.memory_space<vmem>>, vector<4x128xf32>
      tpu.vector_store %arg4[%c0_20, %c0_21], %31 {strides = array<i32>} : memref<4x128xf32, #tpu.memory_space<vmem>>, vector<4x128xf32>,
      %cst_22 = arith.constant 0.000000e+00 : f32
      %33 = vector.broadcast %cst_22 : f32 to vector<4x128xf32>
      %c0_23 = arith.constant 0 : index
      %c0_24 = arith.constant 0 : index
      %34 = vector.load %arg5[%c0_23, %c0_24] : memref<4x128xf32, #tpu.memory_space<vmem>>, vector<4x128xf32>
      tpu.vector_store %arg5[%c0_23, %c0_24], %33 {strides = array<i32>} : memref<4x128xf32, #tpu.memory_space<vmem>>, vector<4x128xf32>,
      %c0_25 = arith.constant 0 : index
      %c0_26 = arith.constant 0 : index
      %c0_27 = arith.constant 0 : index
      %35 = vector.load %arg2[%c0_25, %c0_26, %c0_27] : memref<1x4x256xf32, #tpu.memory_space<vmem>>, vector<1x4x1xf32>
      %36 = vector.shape_cast %35 : vector<1x4x1xf32> to vector<4x1xf32>
      %37 = vector.shape_cast %36 : vector<4x1xf32> to vector<4x1xf32>
      %38 = vector.broadcast %37 : vector<4x1xf32> to vector<4x128xf32>
      %c0_28 = arith.constant 0 : index
      %c0_29 = arith.constant 0 : index
      %39 = vector.load %arg6[%c0_28, %c0_29] : memref<4x128xf32, #tpu.memory_space<vmem>>, vector<4x128xf32>
      tpu.vector_store %arg6[%c0_28, %c0_29], %38 {strides = array<i32>} : memref<4x128xf32, #tpu.memory_space<vmem>>, vector<4x128xf32>,
    } else {
    }
    %c0 = arith.constant 0 : index
    %c0_3 = arith.constant 0 : index
    %8 = vector.load %arg6[%c0, %c0_3] : memref<4x128xf32, #tpu.memory_space<vmem>>, vector<4x128xf32>
    %cst = arith.constant 0.000000e+00 : f32
    %9 = vector.broadcast %cst : f32 to vector<4x128xf32>
    %cst_4 = arith.constant 0.000000e+00 : f32
    %10 = vector.broadcast %cst_4 : f32 to vector<4x128xf32>
    %c0_5 = arith.constant 0 : index
    %c0_6 = arith.constant 0 : index
    %c0_7 = arith.constant 0 : index
    %11 = vector.load %arg2[%c0_5, %c0_6, %c0_7] : memref<1x4x256xf32, #tpu.memory_space<vmem>>, vector<1x4x128xf32>
    %12 = vector.shape_cast %11 : vector<1x4x128xf32> to vector<4x128xf32>
    %13 = arith.subf %12, %8 : vector<4x128xf32>
    %14 = arith.addf %9, %13 : vector<4x128xf32>
    %15 = arith.mulf %13, %13 : vector<4x128xf32>
    %16 = arith.addf %10, %15 : vector<4x128xf32>
    %c0_8 = arith.constant 0 : index
    %c0_9 = arith.constant 0 : index
    %c128 = arith.constant 128 : index
    %17 = vector.load %arg2[%c0_8, %c0_9, %c128] : memref<1x4x256xf32, #tpu.memory_space<vmem>>, vector<1x4x128xf32>
    %18 = vector.shape_cast %17 : vector<1x4x128xf32> to vector<4x128xf32>
    %19 = arith.subf %18, %8 : vector<4x128xf32>
    %20 = arith.addf %14, %19 : vector<4x128xf32>
    %21 = arith.mulf %19, %19 : vector<4x128xf32>
    %22 = arith.addf %16, %21 : vector<4x128xf32>
    %c0_10 = arith.constant 0 : index
    %c0_11 = arith.constant 0 : index
    %23 = vector.load %arg4[%c0_10, %c0_11] : memref<4x128xf32, #tpu.memory_space<vmem>>, vector<4x128xf32>
    %24 = arith.addf %23, %20 : vector<4x128xf32>
    %c0_12 = arith.constant 0 : index
    %c0_13 = arith.constant 0 : index
    %25 = vector.load %arg4[%c0_12, %c0_13] : memref<4x128xf32, #tpu.memory_space<vmem>>, vector<4x128xf32>
    tpu.vector_store %arg4[%c0_12, %c0_13], %24 {strides = array<i32>} : memref<4x128xf32, #tpu.memory_space<vmem>>, vector<4x128xf32>,
    %c0_14 = arith.constant 0 : index
    %c0_15 = arith.constant 0 : index
    %26 = vector.load %arg5[%c0_14, %c0_15] : memref<4x128xf32, #tpu.memory_space<vmem>>, vector<4x128xf32>
    %27 = arith.addf %26, %22 : vector<4x128xf32>
    %c0_16 = arith.constant 0 : index
    %c0_17 = arith.constant 0 : index
    %28 = vector.load %arg5[%c0_16, %c0_17] : memref<4x128xf32, #tpu.memory_space<vmem>>, vector<4x128xf32>
    tpu.vector_store %arg5[%c0_16, %c0_17], %27 {strides = array<i32>} : memref<4x128xf32, #tpu.memory_space<vmem>>, vector<4x128xf32>,
    %29 = arith.extui %5 : i1 to i32
    %c0_i32_18 = arith.constant 0 : i32
    %30 = arith.cmpi ne, %29, %c0_i32_18 : i32
    scf.if %30 {
      %c0_19 = arith.constant 0 : index
      %c0_20 = arith.constant 0 : index
      %31 = vector.load %arg4[%c0_19, %c0_20] : memref<4x128xf32, #tpu.memory_space<vmem>>, vector<4x128xf32>
      %cst_21 = arith.constant dense<0.000000e+00> : vector<4xf32>
      %32 = vector.multi_reduction <add>, %31, %cst_21 [1] : vector<4x128xf32> to vector<4xf32>
      %33 = vector.shape_cast %32 : vector<4xf32> to vector<4x1xf32>
      %c0_22 = arith.constant 0 : index
      %c0_23 = arith.constant 0 : index
      %34 = vector.load %arg5[%c0_22, %c0_23] : memref<4x128xf32, #tpu.memory_space<vmem>>, vector<4x128xf32>
      %cst_24 = arith.constant dense<0.000000e+00> : vector<4xf32>
      %35 = vector.multi_reduction <add>, %34, %cst_24 [1] : vector<4x128xf32> to vector<4xf32>
      %36 = vector.shape_cast %35 : vector<4xf32> to vector<4x1xf32>
      %c0_25 = arith.constant 0 : index
      %c0_26 = arith.constant 0 : index
      %37 = vector.load %arg6[%c0_25, %c0_26] : memref<4x128xf32, #tpu.memory_space<vmem>>, vector<4x1xf32>
      %cst_27 = arith.constant 5.120000e+02 : f32
      %38 = vector.broadcast %cst_27 : f32 to vector<4x1xf32>
      %39 = arith.divf %33, %38 : vector<4x1xf32>
      %40 = arith.addf %37, %39 : vector<4x1xf32>
      %cst_28 = arith.constant 5.120000e+02 : f32
      %41 = vector.broadcast %cst_28 : f32 to vector<4x1xf32>
      %42 = arith.divf %33, %41 : vector<4x1xf32>
      %43 = arith.mulf %33, %42 : vector<4x1xf32>
      %44 = arith.subf %36, %43 : vector<4x1xf32>
      %cst_29 = arith.constant 0.000000e+00 : f32
      %45 = vector.broadcast %cst_29 : f32 to vector<4x1xf32>
      %46 = arith.maximumf %44, %45 : vector<4x1xf32>
      %cst_30 = arith.constant 5.110000e+02 : f32
      %47 = vector.broadcast %cst_30 : f32 to vector<4x1xf32>
      %48 = arith.divf %46, %47 : vector<4x1xf32>
      %49 = math.sqrt %48 : vector<4x1xf32>
      %50 = vector.shape_cast %40 : vector<4x1xf32> to vector<1x4x1xf32>
      %cst_31 = arith.constant dense<0.000000e+00> : vector<1xf32>
      %51 = vector.multi_reduction <add>, %50, %cst_31 [1, 2] : vector<1x4x1xf32> to vector<1xf32>
      %52 = vector.shape_cast %51 : vector<1xf32> to vector<1x1x1xf32>
      %53 = vector.extract %52[0, 0, 0] : f32 from vector<1x1x1xf32>
      %cst_32 = arith.constant 4.000000e+00 : f32
      %54 = arith.divf %53, %cst_32 : f32
      %55 = vector.broadcast %54 : f32 to vector<4x1xf32>
      %56 = arith.subf %40, %55 : vector<4x1xf32>
      %57 = arith.mulf %56, %56 : vector<4x1xf32>
      %58 = vector.shape_cast %57 : vector<4x1xf32> to vector<1x4x1xf32>
      %cst_33 = arith.constant dense<0.000000e+00> : vector<1xf32>
      %59 = vector.multi_reduction <add>, %58, %cst_33 [1, 2] : vector<1x4x1xf32> to vector<1xf32>
      %60 = vector.shape_cast %59 : vector<1xf32> to vector<1x1x1xf32>
      %61 = vector.extract %60[0, 0, 0] : f32 from vector<1x1x1xf32>
      %cst_34 = arith.constant 5.120000e+02 : f32
      %62 = arith.mulf %cst_34, %61 : f32
      %63 = vector.shape_cast %46 : vector<4x1xf32> to vector<1x4x1xf32>
      %cst_35 = arith.constant dense<0.000000e+00> : vector<1xf32>
      %64 = vector.multi_reduction <add>, %63, %cst_35 [1, 2] : vector<1x4x1xf32> to vector<1xf32>
      %65 = vector.shape_cast %64 : vector<1xf32> to vector<1x1x1xf32>
      %66 = vector.extract %65[0, 0, 0] : f32 from vector<1x1x1xf32>
      %67 = arith.addf %66, %62 : f32
      %cst_36 = arith.constant 0.000000e+00 : f32
      %68 = arith.maximumf %67, %cst_36 : f32
      %cst_37 = arith.constant 2.047000e+03 : f32
      %69 = arith.divf %68, %cst_37 : f32
      %c0_38 = arith.constant 0 : index
      %c0_39 = arith.constant 0 : index
      %70 = memref.load %arg3[%c0_38, %c0_39] : memref<1x4xf32, #tpu.memory_space<smem>>
      memref.store %54, %arg3[%c0_38, %c0_39] : memref<1x4xf32, #tpu.memory_space<smem>>
      %c0_40 = arith.constant 0 : index
      %c1 = arith.constant 1 : index
      %71 = memref.load %arg3[%c0_40, %c1] : memref<1x4xf32, #tpu.memory_space<smem>>
      memref.store %54, %arg3[%c0_40, %c1] : memref<1x4xf32, #tpu.memory_space<smem>>
      %72 = vector.shape_cast %49 : vector<4x1xf32> to vector<1x4x1xf32>
      %cst_41 = arith.constant dense<0.000000e+00> : vector<1xf32>
      %73 = vector.multi_reduction <add>, %72, %cst_41 [1, 2] : vector<1x4x1xf32> to vector<1xf32>
      %74 = vector.shape_cast %73 : vector<1xf32> to vector<1x1x1xf32>
      %75 = vector.extract %74[0, 0, 0] : f32 from vector<1x1x1xf32>
      %cst_42 = arith.constant 4.000000e+00 : f32
      %76 = arith.divf %75, %cst_42 : f32
      %c0_43 = arith.constant 0 : index
      %c2 = arith.constant 2 : index
      %77 = memref.load %arg3[%c0_43, %c2] : memref<1x4xf32, #tpu.memory_space<smem>>
      memref.store %76, %arg3[%c0_43, %c2] : memref<1x4xf32, #tpu.memory_space<smem>>
      %78 = math.sqrt %69 : f32
      %c0_44 = arith.constant 0 : index
      %c3 = arith.constant 3 : index
      %79 = memref.load %arg3[%c0_44, %c3] : memref<1x4xf32, #tpu.memory_space<smem>>
      memref.store %78, %arg3[%c0_44, %c3] : memref<1x4xf32, #tpu.memory_space<smem>>
    } else {
    }
    return
  }
  func.func @transform_0(%arg0: i32, %arg1: i32) -> (i32, i32, i32) {
    %c0_i32 = arith.constant 0 : i32
    %c0_i32_0 = arith.constant 0 : i32
    return %arg0, %c0_i32, %arg1 : i32, i32, i32
  }
  func.func @transform_1(%arg0: i32, %arg1: i32) -> (i32, i32) {
    %c0_i32 = arith.constant 0 : i32
    %c0_i32_0 = arith.constant 0 : i32
    %c0_i32_1 = arith.constant 0 : i32
    return %c0_i32, %c0_i32_0 : i32, i32
  }
}

</mosaic_0001>

<llo_original>
// kernel: tpu_custom_call.1
$region0: #{tpu_custom_call.1}
  #allocation0 [shape = 'u32[]', space=smem, size = 0x4, offset = 0x4, fixed_abs, tag = 'smem constant byte address 0x4 - core index']
  #allocation1 [shape = 'u32[72,128]{1,0:T(1,128)}', space=vmem, size = 0x9000, scoped, tag = 'internal scratch']
  #allocation2 [shape = 'f32[4,128]{1,0:T(4,128)}', space=vmem, size = 0x800, scoped, tag = 'scratch operand']
  #allocation3 [shape = 'f32[4,128]{1,0:T(4,128)}', space=vmem, size = 0x800, scoped, tag = 'scratch operand']
  #allocation4 [shape = 'f32[4,128]{1,0:T(4,128)}', space=vmem, size = 0x800, scoped, tag = 'scratch operand']
  %s0 = inlined_call_operand.hbm [shape: f32[2,4,256], index: 0, kind: input, shape index: {}]
  %s1 = inlined_call_operand.hbm [shape: f32[1,4], index: 1, kind: output, shape index: {}]
  %s2 = sld [smem:[#allocation0]]
  $region49: #{tpu_custom_call.1} parent=0
    _
  %s4 = ssub.s32 1, %s2
  %s5 = scalar_select 0, %s4, %s2
  $region1: #{tpu_custom_call.1} parent=0
    #allocation5 [shape = 'u8[8192]{0}', space=vmem, size = 0x2000, scoped, tag = 'input window, operand 0']
    #allocation6 [shape = 's32[2]{0}', space=sflag, size = 0x8, scoped, tag = 'scoped memory for tpu_custom_call.1']
    #allocation7 [shape = 's32[2]{0}', space=sflag, size = 0x8, scoped, tag = 'scoped memory for tpu_custom_call.1']
    #allocation8 [shape = 'u8[512]{0}', space=smem, size = 0x200, scoped, tag = 'output window, operand 0, single buffered']
    %6 = vsyncpa [#allocation6], 0
    %s7 = scalar_lea.sflag [#allocation6], 1
    %8 = vsyncpa %s7, 0
    %9 = vsyncpa [#allocation7], 0
    loop: start=0, step=1, limit=4
    $region2: #{tpu_custom_call.1} parent=1 // loop_pre_header
      _
    $region3: #{tpu_custom_call.1} parent=1 // loop_header
      %s11 = sphi 0, %s15
      %p12 = scmp.ge.s32.totalorder %s11, 4
      %s18 = sphi 0, %s30
      %s19 = sphi 0, %s26
      %s20 = sphi 0, %s18
      %s21 = sphi 0, %s19
      %s22 = sphi 0, %s20
      %s23 = sphi 0, %s21
      %s35 = sphi 0, %s37
      %s38 = sphi 0, %s35
      %s39 = sphi 0, %s38
      %s55 = sphi 0, %s39
      %s59 = sphi 0, %s59
      %s61 = sphi 0, %s59
      %s62 = sphi 0, %s61
      %s76 = sphi 0, %s62
    $region4: #{tpu_custom_call.1} parent=1 // loop_header_branch
      %14 = sbr.rel (%p12) target = $region8
    $region5: #{tpu_custom_call.1} parent=1 // loop_body
      %s16 = ssub.s32 %s11, 1
      %s17 = ssub.s32 %s11, 2
      %s24 = sadd.s32 1, %s19
      %p25 = scmp.ge.s32.totalorder %s24, 1
      %s26 = scalar_select %p25, 0, %s24
      %s27 = sadd.s32 1, %s18
      %s28 = scalar_select %p25, %s27, %s18
      %p29 = scmp.ge.s32.totalorder %s28, 2
      %s30 = scalar_select %p29, 0, %s28
      %s31 = ssub.s32 %s18, %s30
      %s32 = ssub.s32 %s19, %s26
      %s33 = sor.u32 %s31, %s32
      %p34 = scmp.eq.s32.totalorder %s33, 0
      %s36 = sadd.s32 %s35, 1
      %s37 = scalar_select %p34, %s35, %s36
      %p40 = pneg %p34
      %p41 = scmp.eq.s32.totalorder %s11, 1
      %p42 = por %p40, %p41
      %p43 = scmp.ne.s32.totalorder %s35, %s38
      %p44 = scmp.eq.s32.totalorder %s11, 0
      %p45 = por %p43, %p44
      %p46 = scmp.ne.s32.totalorder %s35, %s38
      %p47 = scmp.eq.s32.totalorder %s16, 1
      %p48 = por %p46, %p47
      %p49 = scmp.ne.s32.totalorder %s38, %s39
      %p50 = scmp.eq.s32.totalorder %s16, 0
      %p51 = por %p49, %p50
      %p52 = scmp.ne.s32.totalorder %s38, %s39
      %p53 = scmp.eq.s32.totalorder %s17, 1
      %p54 = por %p52, %p53
      %p56 = scmp.ne.s32.totalorder %s39, %s55
      %p57 = scmp.eq.s32.totalorder %s17, 0
      %p58 = por %p56, %p57
      %s60 = sadd.s32 %s59, 1
      %p63 = scmp.eq.s32.totalorder %s11, 1
      %p64 = scmp.ne.s32.totalorder %s59, %s61
      %p65 = scmp.eq.s32.totalorder %s11, 0
      %p66 = por %p64, %p65
      %p67 = scmp.ne.s32.totalorder %s59, %s61
      %p68 = scmp.eq.s32.totalorder %s16, 1
      %p69 = por %p67, %p68
      %p70 = scmp.ne.s32.totalorder %s61, %s62
      %p71 = scmp.eq.s32.totalorder %s16, 0
      %p72 = por %p70, %p71
      %p73 = scmp.ne.s32.totalorder %s61, %s62
      %p74 = scmp.eq.s32.totalorder %s17, 1
      %p75 = por %p73, %p74
      %p77 = scmp.ne.s32.totalorder %s62, %s76
      %p78 = scmp.eq.s32.totalorder %s17, 0
      %p79 = por %p77, %p78
      %p80 = scmp.le.s32.totalorder 1, %s11
      %p81 = scmp.lt.s32.totalorder %s11, 3
      %p82 = pnand %p80, %p81
      %p83 = pneg %p82
      // Predicated region
      $region9: #{tpu_custom_call.1} parent=5 // pred_check
        _
      $region10: #{tpu_custom_call.1} parent=5 // pred_check_branch
        %85 = sbr.rel (%p82) target = $region12
      $region11: #{tpu_custom_call.1} parent=5 // pred_region
        %s86 = ssub.s32 %s11, 1
      $region12: #{tpu_custom_call.1} parent=5 // pred_fallthru
        _
      %p87 = scmp.lt.s32.totalorder %s11, 2
      // Predicated region
      $region13: #{tpu_custom_call.1} parent=5 // pred_check
        %p88 = pneg %p87
      $region14: #{tpu_custom_call.1} parent=5 // pred_check_branch
        %90 = sbr.rel (%p88) target = $region16
      $region15: #{tpu_custom_call.1} parent=5 // pred_region
        // Predicated region
        $region17: #{tpu_custom_call.1} parent=15 // pred_check
          %p91 = pneg %p45
        $region18: #{tpu_custom_call.1} parent=15 // pred_check_branch
          %93 = sbr.rel (%p91) target = $region20
        $region19: #{tpu_custom_call.1} parent=15 // pred_region
          %s94 = sand.u32 %s35, 1
          %s95 = scalar_lea.sflag [#allocation6], %s94
          %s96 = sand.u32 %s35, 1
          %s97 = smul.addr %s96, 8
          %s98 = scalar_lea.vmem [#allocation5], %s97
          %s99 = smul.u32 2, %s19
          %101 = vsyncadd %s95, 0
          %s102 = smul.addr %s18, 2
          %s103 = sadd.s32 %s99, %s102
          %s104 = smul.addr %s103, 4
          %s105 = scalar_lea.hbm %s0, %s104
          %s107 = sshll.u32 %s105, 4
          %s108 = int_to_ptr.hbm [resolvable:$true] %s107
          %s109 = sshll.u32 %s98, 4
          %s110 = int_to_ptr.vmem [resolvable:$true] %s109
          %112 = dma.hbm_to_vmem [thread:$0]  %s108, 128, %s110, %s95
        $region20: #{tpu_custom_call.1} parent=15 // pred_fallthru
          _
      $region16: #{tpu_custom_call.1} parent=5 // pred_fallthru
        _
      %p113 = scmp.le.s32.totalorder 1, %s11
      %p114 = scmp.lt.s32.totalorder %s11, 3
      %p115 = pnand %p113, %p114
      %p116 = pneg %p115
      // Predicated region
      $region21: #{tpu_custom_call.1} parent=5 // pred_check
        _
      $region22: #{tpu_custom_call.1} parent=5 // pred_check_branch
        %118 = sbr.rel (%p115) target = $region24
      $region23: #{tpu_custom_call.1} parent=5 // pred_region
        %s119 = ssub.s32 %s11, 1
        %s120 = sand.u32 %s38, 1
        %s121 = scalar_lea.sflag [#allocation6], %s120
        %s122 = sand.u32 %s38, 1
        %s123 = smul.addr %s122, 8
        %s124 = scalar_lea.vmem [#allocation5], %s123
        // Predicated region
        $region25: #{tpu_custom_call.1} parent=23 // pred_check
          %p125 = pneg %p51
        $region26: #{tpu_custom_call.1} parent=23 // pred_check_branch
          %127 = sbr.rel (%p125) target = $region28
        $region27: #{tpu_custom_call.1} parent=23 // pred_region
          %129 = dma.done %s121, 128
        $region28: #{tpu_custom_call.1} parent=23 // pred_fallthru
          _
        %s130 = sand.u32 %s38, 1
        %s131 = scalar_lea.sflag [#allocation6], %s130
        %s132 = sand.u32 %s38, 1
        %s133 = smul.addr %s132, 8
        %s134 = scalar_lea.vmem [#allocation5], %s133
        %p135 = pneg %p51
        %p136 = pneg %p48
        %p137 = pneg %p72
        %p138 = pneg %p69
        %s139 = smul.u32 2, %s21
        %p140 = scmp.eq.s32.totalorder %s20, 0
        %p141 = scmp.eq.s32.totalorder %s21, 0
        %p142 = pnand %p140, %p141
        %p143 = pneg %p142
        %p144 = scmp.eq.s32.totalorder %s20, 1
        %p145 = pnand %p144, %p141
        %p146 = pneg %p145
        // Predicated region
        $region29: #{tpu_custom_call.1} parent=23 // pred_check
          _
        $region30: #{tpu_custom_call.1} parent=23 // pred_check_branch
          %148 = sbr.rel (%p142) target = $region32
        $region31: #{tpu_custom_call.1} parent=23 // pred_region
          %149 = vst [vmem:[#allocation2] sm:$0xf] 0.0
          %150 = vst [vmem:[#allocation3] sm:$0xf] 0.0
          %v151 = vld [vmem:[%s124] sm:$0xf]
          %153 = vset.pattern.permute.xlu0 0
          %154 = vperm.xlu0 %153, %v151
          %v155 = vpop.permute.xlu0 %154
          %v158 = vunpack.c.l.s4 839922192
          %v159 = vunpack.c.0.s8 %v158
          %v160 = vperm.slane %v155, %v159
          %161 = vst [vmem:[#allocation4] sm:$0xf] %v160
        $region32: #{tpu_custom_call.1} parent=23 // pred_fallthru
          _
        %v162 = vld [vmem:[#allocation4] sm:$0xf]
        %v163 = vld [vmem:[%s124] sm:$0xf]
        %v164 = vsub.f32 %v163, %v162
        %v165 = vadd.f32 %v164, 0.0
        %v166 = vmul.f32 %v164, %v164
        %v167 = vadd.f32 %v166, 0.0
        %v168 = vld [vmem:[%s124 + $0x4] sm:$0xf]
        %v169 = vsub.f32 %v168, %v162
        %v170 = vadd.f32 %v165, %v169
        %v171 = vmul.f32 %v169, %v169
        %v172 = vadd.f32 %v167, %v171
        %v173 = vld [vmem:[#allocation2] sm:$0xf]
        %v174 = vadd.f32 %v173, %v170
        %175 = vst [vmem:[#allocation2] sm:$0xf] %v174
        %v176 = vld [vmem:[#allocation3] sm:$0xf]
        %v177 = vadd.f32 %v176, %v172
        %178 = vst [vmem:[#allocation3] sm:$0xf] %v177
        // Predicated region
        $region33: #{tpu_custom_call.1} parent=23 // pred_check
          _
        $region34: #{tpu_custom_call.1} parent=23 // pred_check_branch
          %180 = sbr.rel (%p145) target = $region36
        $region35: #{tpu_custom_call.1} parent=23 // pred_region
          %v181 = vld [vmem:[#allocation2] sm:$0xf]
          %vm182 = vcmask 1043456
          %v183 = vsel %vm182, %v181, 0.0
          %184 = vadd.xlane.f32.xlu0 %v183
          %v185 = vpop.xlane.xlu0 %184
          %v186 = vld [vmem:[#allocation3] sm:$0xf]
          %v187 = vsel %vm182, %v186, 0.0
          %188 = vadd.xlane.f32.xlu0 %v187
          %v189 = vpop.xlane.xlu0 %188
          %v190 = vld [vmem:[#allocation4] sm:$0xf]
          %v191 = vrcp.pop 512.0
          %v192 = vmul.f32 512.0, %v191
          %v193 = vsub.f32 1.0, %v192
          %v194 = vmul.f32 %v191, %v193
          %v195 = vadd.f32 %v191, %v194
          %vm196 = vweird.f32 %v191
          %v197 = vsel %vm196, %v191, %v195
          %v198 = vmul.f32 %v185, %v197
          %v199 = vadd.f32 %v190, %v198
          %v200 = vmul.f32 %v185, %v198
          %v201 = vsub.f32 %v189, %v200
          %v202 = vmax.f32 %v201, 0.0
          %v203 = vrcp.pop 511.0
          %v204 = vmul.f32 511.0, %v203
          %v205 = vsub.f32 1.0, %v204
          %v206 = vmul.f32 %v203, %v205
          %v207 = vadd.f32 %v203, %v206
          %vm208 = vweird.f32 %v203
          %v209 = vsel %vm208, %v203, %v207
          %v210 = vmul.f32 %v202, %v209
          %v211 = vrsqrt.pop %v210
          %v212 = vmul.f32 %v211, %v210
          %v213 = vmul.f32 %v212, %v211
          %v214 = vmul.f32 0.5, %v213
          %v215 = vsub.f32 1.5, %v214
          %v216 = vmul.f32 %v211, %v215
          %v217 = vmul.f32 %v210, %v216
          %vm218 = vcmp.eq.f32.partialorder %v210, inf
          %v219 = vsel %vm218, %v210, %v217
          %vm220 = vcmp.eq.f32.partialorder %v210, 0.0
          %v221 = vand.u32 %v210, 2147483648
          %v222 = vsel %vm220, %v221, %v219
          %vm223 = vcmask 3072
          %v224 = vsel %vm223, %v199, 0.0
          %225 = vadd.xlane.f32.xlu0 %v224
          %v226 = vpop.xlane.xlu0 %225
          %v227 = vrot.slane %v226, 4
          %v228 = vadd.f32 %v226, %v227
          %v229 = vrot.slane %v228, 2
          %v230 = vadd.f32 %v228, %v229
          %v231 = vrot.slane %v230, 1
          %v232 = vadd.f32 %v230, %v231
          %s233 = vtos %v232
          %v234 = vrcp.pop 4.0
          %v235 = vmul.f32 4.0, %v234
          %v236 = vsub.f32 1.0, %v235
          %v237 = vmul.f32 %v234, %v236
          %v238 = vadd.f32 %v234, %v237
          %vm239 = vweird.f32 %v234
          %v240 = vsel %vm239, %v234, %v238
          %s241 = vtos %v240
          %s242 = smul.f32 %s233, %s241
          %v243 = vstv %s242
          %v244 = vsub.f32 %v199, %v243
          %v245 = vmul.f32 %v244, %v244
          %v246 = vsel %vm223, %v245, 0.0
          %247 = vadd.xlane.f32.xlu0 %v246
          %v248 = vpop.xlane.xlu0 %247
          %v249 = vrot.slane %v248, 4
          %v250 = vadd.f32 %v248, %v249
          %v251 = vrot.slane %v250, 2
          %v252 = vadd.f32 %v250, %v251
          %v253 = vrot.slane %v252, 1
          %v254 = vadd.f32 %v252, %v253
          %s255 = vtos %v254
          %s256 = smul.f32 %s255, 512.0
          %v257 = vsel %vm223, %v202, 0.0
          %258 = vadd.xlane.f32.xlu0 %v257
          %v259 = vpop.xlane.xlu0 %258
          %v260 = vrot.slane %v259, 4
          %v261 = vadd.f32 %v259, %v260
          %v262 = vrot.slane %v261, 2
          %v263 = vadd.f32 %v261, %v262
          %v264 = vrot.slane %v263, 1
          %v265 = vadd.f32 %v263, %v264
          %s266 = vtos %v265
          %s267 = sadd.f32 %s266, %s256
          %s268 = smax.f32 %s267, 0.0
          %v269 = vrcp.pop 2047.0
          %v270 = vmul.f32 2047.0, %v269
          %v271 = vsub.f32 1.0, %v270
          %v272 = vmul.f32 %v269, %v271
          %v273 = vadd.f32 %v269, %v272
          %vm274 = vweird.f32 %v269
          %v275 = vsel %vm274, %v269, %v273
          %s276 = vtos %v275
          %s277 = smul.f32 %s268, %s276
          %s278 = scalar_lea.smem [#allocation8], 0
          %279 = sst [smem:[%s278]] %s242
          %s280 = scalar_lea.smem [#allocation8], 1
          %281 = sst [smem:[%s280]] %s242
          %v282 = vsel %vm223, %v222, 0.0
          %283 = vadd.xlane.f32.xlu0 %v282
          %v284 = vpop.xlane.xlu0 %283
          %v285 = vrot.slane %v284, 4
          %v286 = vadd.f32 %v284, %v285
          %v287 = vrot.slane %v286, 2
          %v288 = vadd.f32 %v286, %v287
          %v289 = vrot.slane %v288, 1
          %v290 = vadd.f32 %v288, %v289
          %s291 = vtos %v290
          %v292 = vrcp.pop 4.0
          %v293 = vmul.f32 4.0, %v292
          %v294 = vsub.f32 1.0, %v293
          %v295 = vmul.f32 %v292, %v294
          %v296 = vadd.f32 %v292, %v295
          %vm297 = vweird.f32 %v292
          %v298 = vsel %vm297, %v292, %v296
          %s299 = vtos %v298
          %s300 = smul.f32 %s291, %s299
          %s301 = scalar_lea.smem [#allocation8], 2
          %302 = sst [smem:[%s301]] %s300
          %v303 = vstv %s277
          %v304 = vrsqrt.pop %v303
          %v305 = vmul.f32 %v304, %v303
          %v306 = vmul.f32 %v305, %v304
          %v307 = vmul.f32 0.5, %v306
          %v308 = vsub.f32 1.5, %v307
          %v309 = vmul.f32 %v304, %v308
          %v310 = vmul.f32 %v303, %v309
          %vm311 = vcmp.eq.f32.partialorder %v303, inf
          %v312 = vsel %vm311, %v303, %v310
          %vm313 = vcmp.eq.f32.partialorder %v303, 0.0
          %v314 = vand.u32 %v303, 2147483648
          %v315 = vsel %vm313, %v314, %v312
          %s316 = vtos %v315
          %s317 = scalar_lea.smem [#allocation8], 3
          %318 = sst [smem:[%s317]] %s316
        $region36: #{tpu_custom_call.1} parent=23 // pred_fallthru
          _
        // Predicated region
        $region37: #{tpu_custom_call.1} parent=23 // pred_check
          %p319 = pneg %p69
        $region38: #{tpu_custom_call.1} parent=23 // pred_check_branch
          %321 = sbr.rel (%p319) target = $region40
        $region39: #{tpu_custom_call.1} parent=23 // pred_region
          %323 = vsyncadd [#allocation7], 0
          %s325 = sshll.u32 %s1, 4
          %s326 = int_to_ptr.hbm [resolvable:$true] %s325
          %328 = dma.smem_to_hbm [#allocation8], 16, %s326, [#allocation7]
        $region40: #{tpu_custom_call.1} parent=23 // pred_fallthru
          _
        // Predicated region
        $region41: #{tpu_custom_call.1} parent=23 // pred_check
          %p329 = pneg %p69
        $region42: #{tpu_custom_call.1} parent=23 // pred_check_branch
          %331 = sbr.rel (%p329) target = $region44
        $region43: #{tpu_custom_call.1} parent=23 // pred_region
          %333 = dma.done [#allocation7], 16
        $region44: #{tpu_custom_call.1} parent=23 // pred_fallthru
          _
        %334 = sfence
      $region24: #{tpu_custom_call.1} parent=5 // pred_fallthru
        _
      %p335 = scmp.le.s32.totalorder 2, %s11
      // Predicated region
      $region45: #{tpu_custom_call.1} parent=5 // pred_check
        %p336 = pneg %p335
      $region46: #{tpu_custom_call.1} parent=5 // pred_check_branch
        %338 = sbr.rel (%p336) target = $region48
      $region47: #{tpu_custom_call.1} parent=5 // pred_region
        %s339 = ssub.s32 %s11, 2
      $region48: #{tpu_custom_call.1} parent=5 // pred_fallthru
        _
    $region6: #{tpu_custom_call.1} parent=1 // loop_footer
      %s15 = sadd.s32 1, %s11
    $region7: #{tpu_custom_call.1} parent=1 // loop_footer_branch
      %10 = sbr.rel target = $region3
    $region8: #{tpu_custom_call.1} parent=1 // loop_exit
      _
    %340 = vsyncpa [#allocation6], 1
    %s341 = scalar_lea.sflag [#allocation6], 1
    %342 = vsyncpa %s341, 1
    %343 = vsyncpa [#allocation7], 1
    %s344 = scalar_lea.sflag [#allocation7], 1
    %345 = vsyncpa %s344, 1

</llo_original>
